<compile_context>
chip_gen: v6e
topology: v6e:2x2x1
jax: 0.10.0
libtpu: 0.0.40
codegen_flags: <defaults>
</compile_context>

<pallas_src>
import functools

import jax
import jax.numpy as jnp
from jax.experimental import pallas as pl
from jax.experimental.pallas import tpu as pltpu


# ----------------------------- Pallas kernel ------------------------------ #
def _moe_kernel(E, H, K,
                x_ref, w1g_ref, b1g_ref, w2g_ref, b2g_ref,
                w1all_ref, b1all_ref, w2stk_ref, b2all_ref,
                expand_ref, pool_ref, out_ref):
    x = x_ref[...]                                        # (N, D)

    # ---- Gating network: Linear(D,64) -> relu -> Linear(64,E) -> softmax ---
    hg = jnp.dot(x, w1g_ref[...],
                 preferred_element_type=jnp.float32) + b1g_ref[...]
    hg = jnp.maximum(hg, 0.0)
    logits = jnp.dot(hg.astype(w2g_ref.dtype), w2g_ref[...],
                     preferred_element_type=jnp.float32) + b2g_ref[...]
    logits = logits - jnp.max(logits, axis=-1, keepdims=True)
    expw = jnp.exp(logits)
    gates = expw * pl.reciprocal(jnp.sum(expw, axis=-1, keepdims=True),
                                 approx=True)             # (N, E) f32

    # ---- Top-k selection: keep the k largest gates per token, zero rest ----
    col_idx = jax.lax.broadcasted_iota(jnp.int32, gates.shape, 1)
    remaining = gates
    selected = jnp.zeros(gates.shape, dtype=jnp.bool_)
    for _ in range(K):
        row_max = jnp.max(remaining, axis=-1, keepdims=True)
        is_max = remaining == row_max
        first_idx = jnp.min(jnp.where(is_max, col_idx, E),
                            axis=-1, keepdims=True)       # lowest-index tiebreak
        sel = col_idx == first_idx
        selected = jnp.logical_or(selected, sel)
        remaining = jnp.where(sel, -jnp.inf, remaining)
    masked_gates = jnp.where(selected, gates, 0.0)        # (N, E) f32

    # ---- Fused experts: one (N,D)@(D,E*H) matmul for all first layers ------
    h_all = jnp.dot(x, w1all_ref[...],
                    preferred_element_type=jnp.float32) + b1all_ref[...]
    h_all = jnp.maximum(h_all, 0.0)                       # (N, E*H) f32

    # Broadcast gate over each expert's H-chunk via a lane-dense matmul:
    # (N,E)@(E,E*H) with expand[e, e*H:(e+1)*H] = 1.
    gate_rep = jnp.dot(masked_gates, expand_ref[...],
                       preferred_element_type=jnp.float32)
    h_gated = h_all * gate_rep                            # one VPU multiply

    # Second expert layers fused: (N,E*H)@(E*H,O), plus gate-weighted biases.
    y = jnp.dot(h_gated.astype(w2stk_ref.dtype), w2stk_ref[...],
                preferred_element_type=jnp.float32)
    y = y + jnp.dot(masked_gates, b2all_ref[...],
                    preferred_element_type=jnp.float32)   # (N, O)

    # ---- Mean over `few` per batch: (B,N)@(N,O), single full-block store ---
    out_ref[...] = jnp.dot(pool_ref[...], y,
                           preferred_element_type=jnp.float32)


# ------------------------------- Wrapper ----------------------------------- #
def deepseek_moe(x, params, *, num_experts, k, compute_dtype=jnp.float32):
    """x: (B, FEW, D) float32 -> (B, 1, 1, O) float32.

    compute_dtype=jnp.bfloat16 halves MXU cycles on v6e/v7x (f32 accumulation
    kept); use a ~2e-2 tolerance against an f32 reference in that mode.
    """
    B, FEW, D = x.shape
    w1g, b1g, w2g, b2g, we1, be1, we2, be2 = params
    H = w1g.shape[1]
    E = num_experts
    O = we2.shape[2]
    N = B * FEW
    EH = E * H

    cd = compute_dtype
    f32 = jnp.float32

    # ---- One-time layout plumbing (wrapper-side, free for XLA) -------------
    x_tok = x.reshape(N, D).astype(cd)
    w1all = jnp.transpose(we1, (1, 0, 2)).reshape(D, EH).astype(cd)   # (D, E*H)
    b1all = be1[:, 0, :].reshape(1, EH).astype(f32)                   # (1, E*H)
    w2stk = we2.reshape(EH, O).astype(cd)                             # (E*H, O)
    b2all = be2[:, 0, :].astype(f32)                                  # (E, O)
    expand = jnp.repeat(jnp.eye(E, dtype=f32), H, axis=1)             # (E, E*H)
    pool = jnp.repeat(jnp.eye(B, dtype=f32), FEW, axis=1) / FEW       # (B, N)

    def full_spec(shape):
        nd = len(shape)
        return pl.BlockSpec(shape, lambda i, nd=nd: (0,) * nd)

    kernel = functools.partial(_moe_kernel, E, H, k)

    out2d = pl.pallas_call(
        kernel,
        out_shape=jax.ShapeDtypeStruct((B, O), jnp.float32),
        grid=(1,),
        in_specs=[
            full_spec((N, D)),        # x_tok
            full_spec((D, H)),        # gating W1
            full_spec((1, H)),        # gating b1
            full_spec((H, E)),        # gating W2
            full_spec((1, E)),        # gating b2
            full_spec((D, EH)),       # fused experts W1
            full_spec((1, EH)),       # fused experts b1
            full_spec((EH, O)),       # stacked experts W2
            full_spec((E, O)),        # experts b2 (per-expert rows)
            full_spec((E, EH)),       # gate-expand matrix
            full_spec((B, N)),        # mean-pooling matrix
        ],
        out_specs=full_spec((B, O)),
        compiler_params=pltpu.CompilerParams(
            dimension_semantics=("arbitrary",)),
    )(x_tok, w1g.astype(cd), b1g.astype(f32), w2g.astype(cd), b2g.astype(f32),
      w1all, b1all, w2stk, b2all, expand, pool)

    # Lane-dense 2-D kernel output; reshape to the torch return shape outside.
    return out2d[:, None, None, :]


# --------------------------- Parameter init -------------------------------- #
def init_params(key, input_dim, num_experts, output_dim, hidden=64):
    """Deterministic init mimicking torch's default Linear init (±1/sqrt(fan_in))."""
    ks = jax.random.split(key, 5)

    def lin(kw, kb, fan_in, fan_out):
        bound = 1.0 / jnp.sqrt(fan_in)
        w = jax.random.uniform(kw, (fan_in, fan_out), jnp.float32, -bound, bound)
        b = jax.random.uniform(kb, (1, fan_out), jnp.float32, -bound, bound)
        return w, b

    # gating network
    w1g, b1g = lin(ks[0], ks[1], input_dim, hidden)
    w2g, b2g = lin(ks[2], ks[3], hidden, num_experts)

    # experts (stacked along leading E axis)
    we1, be1, we2, be2 = [], [], [], []
    for e in range(num_experts):
        w1, b1 = lin(jax.random.fold_in(ks[4], 4 * e),
                     jax.random.fold_in(ks[4], 4 * e + 1), input_dim, hidden)
        w2, b2 = lin(jax.random.fold_in(ks[4], 4 * e + 2),
                     jax.random.fold_in(ks[4], 4 * e + 3), hidden, output_dim)
        we1.append(w1); be1.append(b1); we2.append(w2); be2.append(b2)
    return (w1g, b1g, w2g, b2g,
            jnp.stack(we1),    # (E, D, H)
            jnp.stack(be1),    # (E, 1, H)
            jnp.stack(we2),    # (E, H, O)
            jnp.stack(be2))    # (E, 1, O)


# ------------------------------ Reference ---------------------------------- #
def reference_moe(x, params, *, num_experts, k):
    """Pure-JAX reference replicating the torch forward exactly."""
    B, FEW, D = x.shape
    w1g, b1g, w2g, b2g, we1, be1, we2, be2 = params
    xt = x.reshape(B * FEW, D)
    hg = jax.nn.relu(xt @ w1g + b1g)
    gates = jax.nn.softmax(hg @ w2g + b2g, axis=-1).reshape(B, FEW, num_experts)
    h = jax.nn.relu(jnp.einsum('nd,edh->neh', xt, we1) + be1[:, 0, :][None])
    eo = jnp.einsum('neh,eho->neo', h, we2) + be2[:, 0, :][None]
    eo = eo.reshape(B, FEW, num_experts, -1)
    topv, topi = jax.lax.top_k(gates, k)
    gathered = jnp.take_along_axis(eo, topi[..., None], axis=2)
    y = jnp.sum(gathered * topv[..., None], axis=2)
    y = jnp.mean(y, axis=1, keepdims=True)
    return y[:, :, None, :]


# --------------------------------- Main ------------------------------------ #
if __name__ == "__main__":
    INPUT_DIM = 32
    NUM_EXPERTS = 8
    OUTPUT_DIM = 32
    K = 3
    BATCH = 2
    FEW = 8

    key = jax.random.PRNGKey(0)
    kx, kp = jax.random.split(key)
    x = jax.random.normal(kx, (BATCH, FEW, INPUT_DIM), jnp.float32)
    params = init_params(kp, INPUT_DIM, NUM_EXPERTS, OUTPUT_DIM)

    moe = jax.jit(functools.partial(deepseek_moe,
                                    num_experts=NUM_EXPERTS, k=K))
    out = jax.block_until_ready(moe(x, params))
    ref = jax.block_until_ready(
        reference_moe(x, params, num_experts=NUM_EXPERTS, k=K))

    assert out.shape == (BATCH, 1, 1, OUTPUT_DIM), out.shape
    max_err = float(jnp.max(jnp.abs(out - ref)))
    # f32 compute; 1e-3 tolerance covers the approx (EUP) softmax reciprocal
    # and the changed (fused) matmul summation order.
    assert jnp.allclose(out, ref, rtol=1e-3, atol=1e-3), max_err

    print("KERNEL_OK")
</pallas_src>

<mosaic_0001>
module attributes {stable_mosaic.version = 11 : i64} {
  func.func @_moe_kernel(%arg0: i32, %arg1: memref<16x32xf32, #tpu.memory_space<vmem>>, %arg2: memref<32x64xf32, #tpu.memory_space<vmem>>, %arg3: memref<1x64xf32, #tpu.memory_space<vmem>>, %arg4: memref<64x8xf32, #tpu.memory_space<vmem>>, %arg5: memref<1x8xf32, #tpu.memory_space<vmem>>, %arg6: memref<32x512xf32, #tpu.memory_space<vmem>>, %arg7: memref<1x512xf32, #tpu.memory_space<vmem>>, %arg8: memref<512x32xf32, #tpu.memory_space<vmem>>, %arg9: memref<8x32xf32, #tpu.memory_space<vmem>>, %arg10: memref<8x512xf32, #tpu.memory_space<vmem>>, %arg11: memref<2x16xf32, #tpu.memory_space<vmem>>, %arg12: memref<2x32xf32, #tpu.memory_space<vmem>>) attributes {dimension_semantics = [#tpu.dimension_semantics<arbitrary>], iteration_bounds = array<i64: 1>, scalar_prefetch = 0 : i64, scratch_operands = 0 : i64, tpu.core_type = #tpu.core_type<tc>, window_params = [{pipeline_mode = #tpu.pipeline_mode<synchronous>, transform_indices = @transform_0, window_bounds = array<i64: 16, 32>}, {pipeline_mode = #tpu.pipeline_mode<synchronous>, transform_indices = @transform_1, window_bounds = array<i64: 32, 64>}, {pipeline_mode = #tpu.pipeline_mode<synchronous>, transform_indices = @transform_2, window_bounds = array<i64: 1, 64>}, {pipeline_mode = #tpu.pipeline_mode<synchronous>, transform_indices = @transform_3, window_bounds = array<i64: 64, 8>}, {pipeline_mode = #tpu.pipeline_mode<synchronous>, transform_indices = @transform_4, window_bounds = array<i64: 1, 8>}, {pipeline_mode = #tpu.pipeline_mode<synchronous>, transform_indices = @transform_5, window_bounds = array<i64: 32, 512>}, {pipeline_mode = #tpu.pipeline_mode<synchronous>, transform_indices = @transform_6, window_bounds = array<i64: 1, 512>}, {pipeline_mode = #tpu.pipeline_mode<synchronous>, transform_indices = @transform_7, window_bounds = array<i64: 512, 32>}, {pipeline_mode = #tpu.pipeline_mode<synchronous>, transform_indices = @transform_8, window_bounds = array<i64: 8, 32>}, {pipeline_mode = #tpu.pipeline_mode<synchronous>, transform_indices = @transform_9, window_bounds = array<i64: 8, 512>}, {pipeline_mode = #tpu.pipeline_mode<synchronous>, transform_indices = @transform_10, window_bounds = array<i64: 2, 16>}, {pipeline_mode = #tpu.pipeline_mode<synchronous>, transform_indices = @transform_11, window_bounds = array<i64: 2, 32>}]} {
    %c0 = arith.constant 0 : index
    %c0_0 = arith.constant 0 : index
    %0 = vector.load %arg1[%c0, %c0_0] : memref<16x32xf32, #tpu.memory_space<vmem>>, vector<16x32xf32>
    %c0_1 = arith.constant 0 : index
    %c0_2 = arith.constant 0 : index
    %1 = vector.load %arg2[%c0_1, %c0_2] : memref<32x64xf32, #tpu.memory_space<vmem>>, vector<32x64xf32>
    %cst = arith.constant dense<0.000000e+00> : vector<16x64xf32>
    %2 = tpu.matmul %0, %1, %cst {dimension_numbers = #tpu.dot_dimension_numbers<[1], [0], [0], [1], [0, 0, 1, 1], [], []>} : vector<16x32xf32>, vector<32x64xf32>, vector<16x64xf32> -> vector<16x64xf32>
    %c0_3 = arith.constant 0 : index
    %c0_4 = arith.constant 0 : index
    %3 = vector.load %arg3[%c0_3, %c0_4] : memref<1x64xf32, #tpu.memory_space<vmem>>, vector<1x64xf32>
    %4 = vector.broadcast %3 : vector<1x64xf32> to vector<16x64xf32>
    %5 = arith.addf %2, %4 : vector<16x64xf32>
    %cst_5 = arith.constant 0.000000e+00 : f32
    %6 = vector.broadcast %cst_5 : f32 to vector<16x64xf32>
    %7 = arith.maximumf %5, %6 : vector<16x64xf32>
    %c0_6 = arith.constant 0 : index
    %c0_7 = arith.constant 0 : index
    %8 = vector.load %arg4[%c0_6, %c0_7] : memref<64x8xf32, #tpu.memory_space<vmem>>, vector<64x8xf32>
    %cst_8 = arith.constant dense<0.000000e+00> : vector<16x8xf32>
    %9 = tpu.matmul %7, %8, %cst_8 {dimension_numbers = #tpu.dot_dimension_numbers<[1], [0], [0], [1], [0, 0, 1, 1], [], []>} : vector<16x64xf32>, vector<64x8xf32>, vector<16x8xf32> -> vector<16x8xf32>
    %c0_9 = arith.constant 0 : index
    %c0_10 = arith.constant 0 : index
    %10 = vector.load %arg5[%c0_9, %c0_10] : memref<1x8xf32, #tpu.memory_space<vmem>>, vector<1x8xf32>
    %11 = vector.broadcast %10 : vector<1x8xf32> to vector<16x8xf32>
    %12 = arith.addf %9, %11 : vector<16x8xf32>
    %cst_11 = arith.constant dense<0xFF800000> : vector<16xf32>
    %13 = vector.multi_reduction <maximumf>, %12, %cst_11 [1] : vector<16x8xf32> to vector<16xf32>
    %14 = vector.shape_cast %13 : vector<16xf32> to vector<16x1xf32>
    %15 = vector.broadcast %14 : vector<16x1xf32> to vector<16x8xf32>
    %16 = arith.subf %12, %15 : vector<16x8xf32>
    %17 = math.exp %16 : vector<16x8xf32>
    %cst_12 = arith.constant dense<0.000000e+00> : vector<16xf32>
    %18 = vector.multi_reduction <add>, %17, %cst_12 [1] : vector<16x8xf32> to vector<16xf32>
    %19 = vector.shape_cast %18 : vector<16xf32> to vector<16x1xf32>
    %20 = tpu.reciprocal %19 {approx = true} : vector<16x1xf32> -> vector<16x1xf32>
    %21 = vector.broadcast %20 : vector<16x1xf32> to vector<16x8xf32>
    %22 = arith.mulf %17, %21 : vector<16x8xf32>
    %23 = tpu.iota {dimensions = array<i32: 1>} : vector<16x8xi32>
    %false = arith.constant false
    %24 = vector.broadcast %false : i1 to vector<16x8xi1>
    %cst_13 = arith.constant dense<0xFF800000> : vector<16xf32>
    %25 = vector.multi_reduction <maximumf>, %22, %cst_13 [1] : vector<16x8xf32> to vector<16xf32>
    %26 = vector.shape_cast %25 : vector<16xf32> to vector<16x1xf32>
    %27 = vector.broadcast %26 : vector<16x1xf32> to vector<16x8xf32>
    %28 = arith.cmpf oeq, %22, %27 : vector<16x8xf32>
    %c8_i32 = arith.constant 8 : i32
    %29 = vector.broadcast %c8_i32 : i32 to vector<16x8xi32>
    %30 = arith.select %28, %23, %29 : vector<16x8xi1>, vector<16x8xi32>
    %cst_14 = arith.constant dense<2147483647> : vector<16xi32>
    %31 = vector.multi_reduction <minsi>, %30, %cst_14 [1] : vector<16x8xi32> to vector<16xi32>
    %32 = vector.shape_cast %31 : vector<16xi32> to vector<16x1xi32>
    %33 = vector.broadcast %32 : vector<16x1xi32> to vector<16x8xi32>
    %34 = arith.cmpi eq, %23, %33 : vector<16x8xi32>
    %35 = arith.ori %24, %34 : vector<16x8xi1>
    %cst_15 = arith.constant 0xFF800000 : f32
    %36 = vector.broadcast %cst_15 : f32 to vector<16x8xf32>
    %37 = arith.select %34, %36, %22 : vector<16x8xi1>, vector<16x8xf32>
    %cst_16 = arith.constant dense<0xFF800000> : vector<16xf32>
    %38 = vector.multi_reduction <maximumf>, %37, %cst_16 [1] : vector<16x8xf32> to vector<16xf32>
    %39 = vector.shape_cast %38 : vector<16xf32> to vector<16x1xf32>
    %40 = vector.broadcast %39 : vector<16x1xf32> to vector<16x8xf32>
    %41 = arith.cmpf oeq, %37, %40 : vector<16x8xf32>
    %c8_i32_17 = arith.constant 8 : i32
    %42 = vector.broadcast %c8_i32_17 : i32 to vector<16x8xi32>
    %43 = arith.select %41, %23, %42 : vector<16x8xi1>, vector<16x8xi32>
    %cst_18 = arith.constant dense<2147483647> : vector<16xi32>
    %44 = vector.multi_reduction <minsi>, %43, %cst_18 [1] : vector<16x8xi32> to vector<16xi32>
    %45 = vector.shape_cast %44 : vector<16xi32> to vector<16x1xi32>
    %46 = vector.broadcast %45 : vector<16x1xi32> to vector<16x8xi32>
    %47 = arith.cmpi eq, %23, %46 : vector<16x8xi32>
    %48 = arith.ori %35, %47 : vector<16x8xi1>
    %cst_19 = arith.constant 0xFF800000 : f32
    %49 = vector.broadcast %cst_19 : f32 to vector<16x8xf32>
    %50 = arith.select %47, %49, %37 : vector<16x8xi1>, vector<16x8xf32>
    %cst_20 = arith.constant dense<0xFF800000> : vector<16xf32>
    %51 = vector.multi_reduction <maximumf>, %50, %cst_20 [1] : vector<16x8xf32> to vector<16xf32>
    %52 = vector.shape_cast %51 : vector<16xf32> to vector<16x1xf32>
    %53 = vector.broadcast %52 : vector<16x1xf32> to vector<16x8xf32>
    %54 = arith.cmpf oeq, %50, %53 : vector<16x8xf32>
    %c8_i32_21 = arith.constant 8 : i32
    %55 = vector.broadcast %c8_i32_21 : i32 to vector<16x8xi32>
    %56 = arith.select %54, %23, %55 : vector<16x8xi1>, vector<16x8xi32>
    %cst_22 = arith.constant dense<2147483647> : vector<16xi32>
    %57 = vector.multi_reduction <minsi>, %56, %cst_22 [1] : vector<16x8xi32> to vector<16xi32>
    %58 = vector.shape_cast %57 : vector<16xi32> to vector<16x1xi32>
    %59 = vector.broadcast %58 : vector<16x1xi32> to vector<16x8xi32>
    %60 = arith.cmpi eq, %23, %59 : vector<16x8xi32>
    %61 = arith.ori %48, %60 : vector<16x8xi1>
    %cst_23 = arith.constant 0.000000e+00 : f32
    %62 = vector.broadcast %cst_23 : f32 to vector<16x8xf32>
    %63 = arith.select %61, %22, %62 : vector<16x8xi1>, vector<16x8xf32>
    %c0_24 = arith.constant 0 : index
    %c0_25 = arith.constant 0 : index
    %64 = vector.load %arg6[%c0_24, %c0_25] : memref<32x512xf32, #tpu.memory_space<vmem>>, vector<32x512xf32>
    %cst_26 = arith.constant dense<0.000000e+00> : vector<16x512xf32>
    %65 = tpu.matmul %0, %64, %cst_26 {dimension_numbers = #tpu.dot_dimension_numbers<[1], [0], [0], [1], [0, 0, 1, 1], [], []>} : vector<16x32xf32>, vector<32x512xf32>, vector<16x512xf32> -> vector<16x512xf32>
    %c0_27 = arith.constant 0 : index
    %c0_28 = arith.constant 0 : index
    %66 = vector.load %arg7[%c0_27, %c0_28] : memref<1x512xf32, #tpu.memory_space<vmem>>, vector<1x512xf32>
    %67 = vector.broadcast %66 : vector<1x512xf32> to vector<16x512xf32>
    %68 = arith.addf %65, %67 : vector<16x512xf32>
    %cst_29 = arith.constant 0.000000e+00 : f32
    %69 = vector.broadcast %cst_29 : f32 to vector<16x512xf32>
    %70 = arith.maximumf %68, %69 : vector<16x512xf32>
    %c0_30 = arith.constant 0 : index
    %c0_31 = arith.constant 0 : index
    %71 = vector.load %arg10[%c0_30, %c0_31] : memref<8x512xf32, #tpu.memory_space<vmem>>, vector<8x512xf32>
    %cst_32 = arith.constant dense<0.000000e+00> : vector<16x512xf32>
    %72 = tpu.matmul %63, %71, %cst_32 {dimension_numbers = #tpu.dot_dimension_numbers<[1], [0], [0], [1], [0, 0, 1, 1], [], []>} : vector<16x8xf32>, vector<8x512xf32>, vector<16x512xf32> -> vector<16x512xf32>
    %73 = arith.mulf %70, %72 : vector<16x512xf32>
    %c0_33 = arith.constant 0 : index
    %c0_34 = arith.constant 0 : index
    %74 = vector.load %arg8[%c0_33, %c0_34] : memref<512x32xf32, #tpu.memory_space<vmem>>, vector<512x32xf32>
    %cst_35 = arith.constant dense<0.000000e+00> : vector<16x32xf32>
    %75 = tpu.matmul %73, %74, %cst_35 {dimension_numbers = #tpu.dot_dimension_numbers<[1], [0], [0], [1], [0, 0, 1, 1], [], []>} : vector<16x512xf32>, vector<512x32xf32>, vector<16x32xf32> -> vector<16x32xf32>
    %c0_36 = arith.constant 0 : index
    %c0_37 = arith.constant 0 : index
    %76 = vector.load %arg9[%c0_36, %c0_37] : memref<8x32xf32, #tpu.memory_space<vmem>>, vector<8x32xf32>
    %cst_38 = arith.constant dense<0.000000e+00> : vector<16x32xf32>
    %77 = tpu.matmul %63, %76, %cst_38 {dimension_numbers = #tpu.dot_dimension_numbers<[1], [0], [0], [1], [0, 0, 1, 1], [], []>} : vector<16x8xf32>, vector<8x32xf32>, vector<16x32xf32> -> vector<16x32xf32>
    %78 = arith.addf %75, %77 : vector<16x32xf32>
    %c0_39 = arith.constant 0 : index
    %c0_40 = arith.constant 0 : index
    %79 = vector.load %arg11[%c0_39, %c0_40] : memref<2x16xf32, #tpu.memory_space<vmem>>, vector<2x16xf32>
    %cst_41 = arith.constant dense<0.000000e+00> : vector<2x32xf32>
    %80 = tpu.matmul %79, %78, %cst_41 {dimension_numbers = #tpu.dot_dimension_numbers<[1], [0], [0], [1], [0, 0, 1, 1], [], []>} : vector<2x16xf32>, vector<16x32xf32>, vector<2x32xf32> -> vector<2x32xf32>
    %c0_42 = arith.constant 0 : index
    %c0_43 = arith.constant 0 : index
    %81 = vector.load %arg12[%c0_42, %c0_43] : memref<2x32xf32, #tpu.memory_space<vmem>>, vector<2x32xf32>
    tpu.vector_store %arg12[%c0_42, %c0_43], %80 {strides = array<i32>} : memref<2x32xf32, #tpu.memory_space<vmem>>, vector<2x32xf32>,
    return
  }
  func.func @transform_0(%arg0: i32) -> (i32, i32) {
    %c0_i32 = arith.constant 0 : i32
    %c0_i32_0 = arith.constant 0 : i32
    %c0_i32_1 = arith.constant 0 : i32
    return %c0_i32, %c0_i32_0 : i32, i32
  }
  func.func @transform_1(%arg0: i32) -> (i32, i32) {
    %c0_i32 = arith.constant 0 : i32
    %c0_i32_0 = arith.constant 0 : i32
    %c0_i32_1 = arith.constant 0 : i32
    return %c0_i32, %c0_i32_0 : i32, i32
  }
  func.func @transform_2(%arg0: i32) -> (i32, i32) {
    %c0_i32 = arith.constant 0 : i32
    %c0_i32_0 = arith.constant 0 : i32
    %c0_i32_1 = arith.constant 0 : i32
    return %c0_i32, %c0_i32_0 : i32, i32
  }
  func.func @transform_3(%arg0: i32) -> (i32, i32) {
    %c0_i32 = arith.constant 0 : i32
    %c0_i32_0 = arith.constant 0 : i32
    %c0_i32_1 = arith.constant 0 : i32
    return %c0_i32, %c0_i32_0 : i32, i32
  }
  func.func @transform_4(%arg0: i32) -> (i32, i32) {
    %c0_i32 = arith.constant 0 : i32
    %c0_i32_0 = arith.constant 0 : i32
    %c0_i32_1 = arith.constant 0 : i32
    return %c0_i32, %c0_i32_0 : i32, i32
  }
  func.func @transform_5(%arg0: i32) -> (i32, i32) {
    %c0_i32 = arith.constant 0 : i32
    %c0_i32_0 = arith.constant 0 : i32
    %c0_i32_1 = arith.constant 0 : i32
    return %c0_i32, %c0_i32_0 : i32, i32
  }
  func.func @transform_6(%arg0: i32) -> (i32, i32) {
    %c0_i32 = arith.constant 0 : i32
    %c0_i32_0 = arith.constant 0 : i32
    %c0_i32_1 = arith.constant 0 : i32
    return %c0_i32, %c0_i32_0 : i32, i32
  }
  func.func @transform_7(%arg0: i32) -> (i32, i32) {
    %c0_i32 = arith.constant 0 : i32
    %c0_i32_0 = arith.constant 0 : i32
    %c0_i32_1 = arith.constant 0 : i32
    return %c0_i32, %c0_i32_0 : i32, i32
  }
  func.func @transform_8(%arg0: i32) -> (i32, i32) {
    %c0_i32 = arith.constant 0 : i32
    %c0_i32_0 = arith.constant 0 : i32
    %c0_i32_1 = arith.constant 0 : i32
    return %c0_i32, %c0_i32_0 : i32, i32
  }
  func.func @transform_9(%arg0: i32) -> (i32, i32) {
    %c0_i32 = arith.constant 0 : i32
    %c0_i32_0 = arith.constant 0 : i32
    %c0_i32_1 = arith.constant 0 : i32
    return %c0_i32, %c0_i32_0 : i32, i32
  }
  func.func @transform_10(%arg0: i32) -> (i32, i32) {
    %c0_i32 = arith.constant 0 : i32
    %c0_i32_0 = arith.constant 0 : i32
    %c0_i32_1 = arith.constant 0 : i32
    return %c0_i32, %c0_i32_0 : i32, i32
  }
  func.func @transform_11(%arg0: i32) -> (i32, i32) {
    %c0_i32 = arith.constant 0 : i32
    %c0_i32_0 = arith.constant 0 : i32
    %c0_i32_1 = arith.constant 0 : i32
    return %c0_i32, %c0_i32_0 : i32, i32
  }
}

</mosaic_0001>

<llo_original>
// kernel: squeeze.2
$region0: #{squeeze.2}
  %s0 = inlined_call_operand.vmem [shape: f32[8,64], index: 0, kind: input, shape index: {}]
  %s1 = inlined_call_operand.vmem [shape: f32[1,512], index: 1, kind: output, shape index: {}]
  $region1: #{squeeze.2} parent=0
    #allocation0 [shape = 'u8[16384]{0}', space=vmem, size = 0x4000, scoped, tag = 'scoped mem for output reshape']
    %v2 = vld [vmem:[%s0] ss:$2 sm:$0xf]
    %vm3 = vcmask 523264
    %4 = vst.msk [vmem:[#allocation0] ss:$8 sm:$0xf] %vm3, %v2
    %s5 = scalar_lea.vmem %s0, 1
    %v6 = vld [vmem:[%s5] ss:$2 sm:$0xf]
    %7 = vrot.lane.b32.xlu0 %v6, 64
    %v8 = vpop.permute.xlu0 %7
    %vm9 = vcmask 1048064
    %10 = vst.msk [vmem:[#allocation0] ss:$8 sm:$0xf] %vm9, %v8
    %s12 = sshll.u32 1, 1
    %s13 = ssub.s32 %s12, 1
    %v15 = vld [vmem:[#allocation0] sm:%s13]
    %s16 = sshll.u32 1, 1
    %s17 = ssub.s32 %s16, 1
    %18 = vst [vmem:[%s1] sm:%s17] %v15
    %s19 = scalar_lea.vmem [#allocation0], 8
    %v20 = vld [vmem:[%s19] sm:%s13]
    %s21 = sshll.u32 1, 1
    %s22 = ssub.s32 %s21, 1
    %s23 = scalar_lea.vmem %s1, 1
    %24 = vst [vmem:[%s23] sm:%s22] %v20
    %s25 = scalar_lea.vmem [#allocation0], 16
    %v26 = vld [vmem:[%s25] sm:%s13]
    %s27 = sshll.u32 1, 1
    %s28 = ssub.s32 %s27, 1
    %s29 = smul.addr 1, 2
    %s30 = scalar_lea.vmem %s1, %s29
    %31 = vst [vmem:[%s30] sm:%s28] %v26
    %s32 = scalar_lea.vmem [#allocation0], 24
    %v33 = vld [vmem:[%s32] sm:%s13]
    %s34 = sshll.u32 1, 1
    %s35 = ssub.s32 %s34, 1
    %s36 = smul.addr 1, 3
    %s37 = scalar_lea.vmem %s1, %s36
    %38 = vst [vmem:[%s37] sm:%s35] %v33

// kernel: deepseek_moe.1
$region0: #{deepseek_moe.1}
  #allocation0 [shape = 'u32[]', space=smem, size = 0x4, offset = 0x4, fixed_abs, tag = 'smem constant byte address 0x4 - core index']
  #allocation1 [shape = 'u32[144,128]{1,0:T(1,128)}', space=vmem, size = 0x12000, scoped, tag = 'internal scratch']
  %s0 = inlined_call_operand.vmem [shape: f32[16,32], index: 0, kind: input, shape index: {}]
  %s1 = inlined_call_operand.vmem [shape: f32[32,64], index: 1, kind: input, shape index: {}]
  %s2 = inlined_call_operand.vmem [shape: f32[1,64], index: 2, kind: input, shape index: {}]
  %s3 = inlined_call_operand.vmem [shape: f32[64,8], index: 3, kind: input, shape index: {}]
  %s4 = inlined_call_operand.vmem [shape: f32[1,8], index: 4, kind: input, shape index: {}]
  %s5 = inlined_call_operand.vmem [shape: f32[32,512], index: 5, kind: input, shape index: {}]
  %s6 = inlined_call_operand.vmem [shape: f32[1,512], index: 6, kind: input, shape index: {}]
  %s7 = inlined_call_operand.vmem [shape: f32[512,32], index: 7, kind: input, shape index: {}]
  %s8 = inlined_call_operand.vmem [shape: f32[8,32], index: 8, kind: input, shape index: {}]
  %s9 = inlined_call_operand.vmem [shape: f32[8,512], index: 9, kind: input, shape index: {}]
  %s10 = inlined_call_operand.vmem [shape: f32[2,16], index: 10, kind: input, shape index: {}]
  %s11 = inlined_call_operand.hbm [shape: f32[2,32], index: 11, kind: output, shape index: {}]
  %s12 = sld [smem:[#allocation0]]
  $region54: #{deepseek_moe.1} parent=0
    _
  %s14 = ssub.s32 1, %s12
  %s15 = scalar_select 0, %s14, %s12
  $region1: #{deepseek_moe.1} parent=0
    #allocation2 [shape = 'u8[1024]{0}', space=vmem, size = 0x400, scoped, tag = 'output window, operand 0, single buffered']
    #allocation3 [shape = 's32[1]{0}', space=sflag, size = 0x4, scoped, tag = 'scoped memory for deepseek_moe.1']
    %16 = vsyncpa [#allocation3], 0
    // Predicated region
    $region2: #{deepseek_moe.1} parent=1 // pred_check
      _
    $region3: #{deepseek_moe.1} parent=1 // pred_check_branch
      %18 = sbr.rel (0) target = $region5
    $region4: #{deepseek_moe.1} parent=1 // pred_region
      _
    $region5: #{deepseek_moe.1} parent=1 // pred_fallthru
      _
    // Predicated region
    $region6: #{deepseek_moe.1} parent=1 // pred_check
      _
    $region7: #{deepseek_moe.1} parent=1 // pred_check_branch
      %20 = sbr.rel (0) target = $region9
    $region8: #{deepseek_moe.1} parent=1 // pred_region
      _
    $region9: #{deepseek_moe.1} parent=1 // pred_fallthru
      _
    // Predicated region
    $region10: #{deepseek_moe.1} parent=1 // pred_check
      _
    $region11: #{deepseek_moe.1} parent=1 // pred_check_branch
      %22 = sbr.rel (0) target = $region13
    $region12: #{deepseek_moe.1} parent=1 // pred_region
      _
    $region13: #{deepseek_moe.1} parent=1 // pred_fallthru
      _
    // Predicated region
    $region14: #{deepseek_moe.1} parent=1 // pred_check
      _
    $region15: #{deepseek_moe.1} parent=1 // pred_check_branch
      %24 = sbr.rel (0) target = $region17
    $region16: #{deepseek_moe.1} parent=1 // pred_region
      _
    $region17: #{deepseek_moe.1} parent=1 // pred_fallthru
      _
    // Predicated region
    $region18: #{deepseek_moe.1} parent=1 // pred_check
      _
    $region19: #{deepseek_moe.1} parent=1 // pred_check_branch
      %26 = sbr.rel (0) target = $region21
    $region20: #{deepseek_moe.1} parent=1 // pred_region
      _
    $region21: #{deepseek_moe.1} parent=1 // pred_fallthru
      _
    // Predicated region
    $region22: #{deepseek_moe.1} parent=1 // pred_check
      _
    $region23: #{deepseek_moe.1} parent=1 // pred_check_branch
      %28 = sbr.rel (0) target = $region25
    $region24: #{deepseek_moe.1} parent=1 // pred_region
      _
    $region25: #{deepseek_moe.1} parent=1 // pred_fallthru
      _
    // Predicated region
    $region26: #{deepseek_moe.1} parent=1 // pred_check
      _
    $region27: #{deepseek_moe.1} parent=1 // pred_check_branch
      %30 = sbr.rel (0) target = $region29
    $region28: #{deepseek_moe.1} parent=1 // pred_region
      _
    $region29: #{deepseek_moe.1} parent=1 // pred_fallthru
      _
    // Predicated region
    $region30: #{deepseek_moe.1} parent=1 // pred_check
      _
    $region31: #{deepseek_moe.1} parent=1 // pred_check_branch
      %32 = sbr.rel (0) target = $region33
    $region32: #{deepseek_moe.1} parent=1 // pred_region
      _
    $region33: #{deepseek_moe.1} parent=1 // pred_fallthru
      _
    // Predicated region
    $region34: #{deepseek_moe.1} parent=1 // pred_check
      _
    $region35: #{deepseek_moe.1} parent=1 // pred_check_branch
      %34 = sbr.rel (0) target = $region37
    $region36: #{deepseek_moe.1} parent=1 // pred_region
      _
    $region37: #{deepseek_moe.1} parent=1 // pred_fallthru
      _
    // Predicated region
    $region38: #{deepseek_moe.1} parent=1 // pred_check
      _
    $region39: #{deepseek_moe.1} parent=1 // pred_check_branch
      %36 = sbr.rel (0) target = $region41
    $region40: #{deepseek_moe.1} parent=1 // pred_region
      _
    $region41: #{deepseek_moe.1} parent=1 // pred_fallthru
      _
    // Predicated region
    $region42: #{deepseek_moe.1} parent=1 // pred_check
      _
    $region43: #{deepseek_moe.1} parent=1 // pred_check_branch
      %38 = sbr.rel (0) target = $region45
    $region44: #{deepseek_moe.1} parent=1 // pred_region
      _
    $region45: #{deepseek_moe.1} parent=1 // pred_fallthru
      _
    %v39 = vld [vmem:[%s0] sm:$0xff]
    %v40 = vld [vmem:[%s0 + $0x8] sm:$0xff]
    %v41 = vld [vmem:[%s1] sm:$0xff]
    %v42 = vld [vmem:[%s1 + $0x8] sm:$0xff]
    %v43 = vld [vmem:[%s1 + $0x10] sm:$0xff]
    %v44 = vld [vmem:[%s1 + $0x18] sm:$0xff]
    %v45 = vld [vmem:[%s2] sm:$0x1]
    %v47 = vlaneseq
    %v48 = vshrl.u32 %v47, 7
    %v49 = vsub.s32 0, %v48
    %v50 = vrot.slane %v45, %v49
    %vm52 = vcmask 261120
    %v54 = vsel %vm52, %v39, 0
    %v57 = vsel %vm52, %v40, 0
    %59 = vmatprep.subr.mxu0 0.0
    %60 = vmatpush1.msra.mxu0 0.0
    %61 = vmatprep.subr.mxu0 0.0
    %62 = vmatpush1.msra.mxu0 0.0
    %63 = vmatprep.subr.mxu0 0.0
    %64 = vmatpush1.msra.mxu0 0.0
    %65 = vmatprep.subr.mxu0 0.0
    %66 = vmatpush1.msra.mxu0 0.0
    %67 = vmatprep.subr.mxu0 0.0
    %68 = vmatpush1.msra.mxu0 0.0
    %69 = vmatprep.subr.mxu0 0.0
    %70 = vmatpush1.msra.mxu0 0.0
    %71 = vmatprep.subr.mxu0 0.0
    %72 = vmatpush1.msra.mxu0 0.0
    %73 = vmatprep.subr.mxu0 0.0
    %74 = vmatpush1.msra.mxu0 0.0
    %75 = vmatprep.subr.mxu0 0.0
    %76 = vmatpush1.msra.mxu0 0.0
    %77 = vmatprep.subr.mxu0 0.0
    %78 = vmatpush1.msra.mxu0 0.0
    %79 = vmatprep.subr.mxu0 0.0
    %80 = vmatpush1.msra.mxu0 0.0
    %81 = vmatprep.subr.mxu0 0.0
    %82 = vmatpush1.msra.mxu0 0.0
    %83 = vmatprep.subr.mxu0 0.0
    %84 = vmatpush1.msra.mxu0 %v44
    %85 = vmatprep.subr.mxu0 0.0
    %86 = vmatpush1.msra.mxu0 %v43
    %87 = vmatprep.subr.mxu0 0.0
    %88 = vmatpush1.msra.mxu0 %v42
    %89 = vmatprep.subr.mxu0 0.0
    %90 = vmatpush1.msra.mxu0 %v41
    %91 = vmatprep.subr.mxu0 0.0
    %92 = vmatpush2.msra.mxu0 0.0
    %93 = vmatprep.subr.mxu0 0.0
    %94 = vmatpush2.msra.mxu0 0.0
    %95 = vmatprep.subr.mxu0 0.0
    %96 = vmatpush2.msra.mxu0 0.0
    %97 = vmatprep.subr.mxu0 0.0
    %98 = vmatpush2.msra.mxu0 0.0
    %99 = vmatprep.subr.mxu0 0.0
    %100 = vmatpush2.msra.mxu0 0.0
    %101 = vmatprep.subr.mxu0 0.0
    %102 = vmatpush2.msra.mxu0 0.0
    %103 = vmatprep.subr.mxu0 0.0
    %104 = vmatpush2.msra.mxu0 0.0
    %105 = vmatprep.subr.mxu0 0.0
    %106 = vmatpush2.msra.mxu0 0.0
    %107 = vmatprep.subr.mxu0 0.0
    %108 = vmatpush2.msra.mxu0 0.0
    %109 = vmatprep.subr.mxu0 0.0
    %110 = vmatpush2.msra.mxu0 0.0
    %111 = vmatprep.subr.mxu0 0.0
    %112 = vmatpush2.msra.mxu0 0.0
    %113 = vmatprep.subr.mxu0 0.0
    %114 = vmatpush2.msra.mxu0 0.0
    %115 = vmatprep.subr.mxu0 0.0
    %116 = vmatpush2.msra.mxu0 0.0
    %117 = vmatprep.subr.mxu0 0.0
    %118 = vmatpush2.msra.mxu0 0.0
    %119 = vmatprep.subr.mxu0 0.0
    %120 = vmatpush2.msra.mxu0 0.0
    %121 = vmatprep.subr.mxu0 0.0
    %122 = vmatpush2.msra.mxu0 0.0
    %123 = vmatprep.mubr.f32.mxu0 0.0
    %124 = vmatmul.mubr.f32.gmra.mxu0 %v54
    %v125 = vpop.f32.mrf.mxu0
    %v126 = vadd.f32 %v50, %v125
    %v127 = vpop.f32.mrf.mxu0
    %128 = vmatprep.mubr.f32.mxu0 0.0
    %129 = vmatmul.mubr.f32.gmra.mxu0 %v57
    %v130 = vpop.f32.mrf.mxu0
    %v131 = vadd.f32 %v50, %v130
    %v132 = vpop.f32.mrf.mxu0
    %133 = vdwg.mxu0
    %v134 = vmax.f32 %v126, 0.0
    %v135 = vmax.f32 %v131, 0.0
    %v136 = vld [vmem:[%s3] sm:$0xff]
    %v137 = vld [vmem:[%s3 + $0x8] sm:$0xff]
    %v138 = vld [vmem:[%s3 + $0x10] sm:$0xff]
    %v139 = vld [vmem:[%s3 + $0x18] sm:$0xff]
    %v140 = vld [vmem:[%s3 + $0x20] sm:$0xff]
    %v141 = vld [vmem:[%s3 + $0x28] sm:$0xff]
    %v142 = vld [vmem:[%s3 + $0x30] sm:$0xff]
    %v143 = vld [vmem:[%s3 + $0x38] sm:$0xff]
    %v144 = vld [vmem:[%s4] sm:$0x1]
    %v146 = vlaneseq
    %v147 = vshrl.u32 %v146, 7
    %v148 = vsub.s32 0, %v147
    %v149 = vrot.slane %v144, %v148
    %vm151 = vcmask 523264
    %v153 = vsel %vm151, %v134, 0
    %v156 = vsel %vm151, %v135, 0
    %158 = vmatprep.subr.mxu0 0.0
    %159 = vmatpush1.msra.mxu0 0.0
    %160 = vmatprep.subr.mxu0 0.0
    %161 = vmatpush1.msra.mxu0 0.0
    %162 = vmatprep.subr.mxu0 0.0
    %163 = vmatpush1.msra.mxu0 0.0
    %164 = vmatprep.subr.mxu0 0.0
    %165 = vmatpush1.msra.mxu0 0.0
    %166 = vmatprep.subr.mxu0 0.0
    %167 = vmatpush1.msra.mxu0 0.0
    %168 = vmatprep.subr.mxu0 0.0
    %169 = vmatpush1.msra.mxu0 0.0
    %170 = vmatprep.subr.mxu0 0.0
    %171 = vmatpush1.msra.mxu0 0.0
    %172 = vmatprep.subr.mxu0 0.0
    %173 = vmatpush1.msra.mxu0 0.0
    %174 = vmatprep.subr.mxu0 0.0
    %175 = vmatpush1.msra.mxu0 %v143
    %176 = vmatprep.subr.mxu0 0.0
    %177 = vmatpush1.msra.mxu0 %v142
    %178 = vmatprep.subr.mxu0 0.0
    %179 = vmatpush1.msra.mxu0 %v141
    %180 = vmatprep.subr.mxu0 0.0
    %181 = vmatpush1.msra.mxu0 %v140
    %182 = vmatprep.subr.mxu0 0.0
    %183 = vmatpush1.msra.mxu0 %v139
    %184 = vmatprep.subr.mxu0 0.0
    %185 = vmatpush1.msra.mxu0 %v138
    %186 = vmatprep.subr.mxu0 0.0
    %187 = vmatpush1.msra.mxu0 %v137
    %188 = vmatprep.subr.mxu0 0.0
    %189 = vmatpush1.msra.mxu0 %v136
    %190 = vmatprep.subr.mxu0 0.0
    %191 = vmatpush2.msra.mxu0 0.0
    %192 = vmatprep.subr.mxu0 0.0
    %193 = vmatpush2.msra.mxu0 0.0
    %194 = vmatprep.subr.mxu0 0.0
    %195 = vmatpush2.msra.mxu0 0.0
    %196 = vmatprep.subr.mxu0 0.0
    %197 = vmatpush2.msra.mxu0 0.0
    %198 = vmatprep.subr.mxu0 0.0
    %199 = vmatpush2.msra.mxu0 0.0
    %200 = vmatprep.subr.mxu0 0.0
    %201 = vmatpush2.msra.mxu0 0.0
    %202 = vmatprep.subr.mxu0 0.0
    %203 = vmatpush2.msra.mxu0 0.0
    %204 = vmatprep.subr.mxu0 0.0
    %205 = vmatpush2.msra.mxu0 0.0
    %206 = vmatprep.subr.mxu0 0.0
    %207 = vmatpush2.msra.mxu0 0.0
    %208 = vmatprep.subr.mxu0 0.0
    %209 = vmatpush2.msra.mxu0 0.0
    %210 = vmatprep.subr.mxu0 0.0
    %211 = vmatpush2.msra.mxu0 0.0
    %212 = vmatprep.subr.mxu0 0.0
    %213 = vmatpush2.msra.mxu0 0.0
    %214 = vmatprep.subr.mxu0 0.0
    %215 = vmatpush2.msra.mxu0 0.0
    %216 = vmatprep.subr.mxu0 0.0
    %217 = vmatpush2.msra.mxu0 0.0
    %218 = vmatprep.subr.mxu0 0.0
    %219 = vmatpush2.msra.mxu0 0.0
    %220 = vmatprep.subr.mxu0 0.0
    %221 = vmatpush2.msra.mxu0 0.0
    %222 = vmatprep.mubr.f32.mxu0 0.0
    %223 = vmatmul.mubr.f32.gmra.mxu0 %v153
    %v224 = vpop.f32.mrf.mxu0
    %v225 = vadd.f32 %v149, %v224
    %v226 = vpop.f32.mrf.mxu0
    %227 = vmatprep.mubr.f32.mxu0 0.0
    %228 = vmatmul.mubr.f32.gmra.mxu0 %v156
    %v229 = vpop.f32.mrf.mxu0
    %v230 = vadd.f32 %v149, %v229
    %v231 = vpop.f32.mrf.mxu0
    %232 = vdwg.mxu0
    %vm233 = vcmask 64512
    %v234 = vsel %vm233, %v225, -inf
    %235 = vmax.xlane.f32.xlu0 %v234
    %v236 = vpop.xlane.xlu0 %235
    %v237 = vsel %vm233, %v230, -inf
    %238 = vmax.xlane.f32.xlu0 %v237
    %v239 = vpop.xlane.xlu0 %238
    %v240 = vsub.f32 %v225, %v236
    %v241 = vsub.f32 %v230, %v239
    %v242 = vmul.f32 %v240, 1.442695
    %v243 = vpow.pop %v242
    %v244 = vmul.f32 %v241, 1.442695
    %v245 = vpow.pop %v244
    %v246 = vsel %vm233, %v243, 0.0
    %247 = vadd.xlane.f32.xlu0 %v246
    %v248 = vpop.xlane.xlu0 %247
    %v249 = vsel %vm233, %v245, 0.0
    %250 = vadd.xlane.f32.xlu0 %v249
    %v251 = vpop.xlane.xlu0 %250
    %v252 = vrcp.pop %v248
    %v253 = vrcp.pop %v251
    %v254 = vmul.f32 %v243, %v252
    %v255 = vmul.f32 %v245, %v253
    %v256 = vlaneseq
    %v257 = vand.u32 %v256, 127
    %v258 = vsel %vm233, %v254, -inf
    %259 = vmax.xlane.f32.xlu0 %v258
    %v260 = vpop.xlane.xlu0 %259
    %v261 = vsel %vm233, %v255, -inf
    %262 = vmax.xlane.f32.xlu0 %v261
    %v263 = vpop.xlane.xlu0 %262
    %vm264 = vcmp.eq.f32.partialorder %v254, %v260
    %vm265 = vcmp.eq.f32.partialorder %v255, %v263
    %v266 = vsel %vm264, %v257, 8
    %v267 = vsel %vm265, %v257, 8
    %v268 = vsel %vm233, %v266, 2147483647
    %v269 = vand.u32 %v268, 65535
    %v270 = vshra.s32 %v268, 16
    %v271 = vcvt.s32.f32 %v269
    %v272 = vcvt.s32.f32 %v270
    %273 = vmin.xlane.f32.xlu0 %v272
    %v274 = vpop.xlane.xlu0 %273
    %vm275 = vcmp.eq.f32.partialorder %v272, %v274
    %v276 = vsel %vm275, %v271, inf
    %277 = vmin.xlane.f32.xlu0 %v276
    %v278 = vpop.xlane.xlu0 %277
    %v279 = vcvt.f32.s32 %v278
    %v280 = vcvt.f32.s32 %v274
    %v281 = vshll.u32 %v280, 16
    %v282 = vadd.s32 %v281, %v279
    %v283 = vsel %vm233, %v267, 2147483647
    %v284 = vand.u32 %v283, 65535
    %v285 = vshra.s32 %v283, 16
    %v286 = vcvt.s32.f32 %v284
    %v287 = vcvt.s32.f32 %v285
    %288 = vmin.xlane.f32.xlu0 %v287
    %v289 = vpop.xlane.xlu0 %288
    %vm290 = vcmp.eq.f32.partialorder %v287, %v289
    %v291 = vsel %vm290, %v286, inf
    %292 = vmin.xlane.f32.xlu0 %v291
    %v293 = vpop.xlane.xlu0 %292
    %v294 = vcvt.f32.s32 %v293
    %v295 = vcvt.f32.s32 %v289
    %v296 = vshll.u32 %v295, 16
    %v297 = vadd.s32 %v296, %v294
    %vm298 = vcmp.eq.s32.totalorder %v257, %v282
    %vm299 = vcmp.eq.s32.totalorder %v257, %v297
    %v300 = vsel %vm298, -inf, %v254
    %v301 = vsel %vm299, -inf, %v255
    %v302 = vsel %vm233, %v300, -inf
    %303 = vmax.xlane.f32.xlu0 %v302
    %v304 = vpop.xlane.xlu0 %303
    %v305 = vsel %vm233, %v301, -inf
    %306 = vmax.xlane.f32.xlu0 %v305
    %v307 = vpop.xlane.xlu0 %306
    %vm308 = vcmp.eq.f32.partialorder %v300, %v304
    %vm309 = vcmp.eq.f32.partialorder %v301, %v307
    %v310 = vsel %vm308, %v257, 8
    %v311 = vsel %vm309, %v257, 8
    %v312 = vsel %vm233, %v310, 2147483647
    %v313 = vand.u32 %v312, 65535
    %v314 = vshra.s32 %v312, 16
    %v315 = vcvt.s32.f32 %v313
    %v316 = vcvt.s32.f32 %v314
    %317 = vmin.xlane.f32.xlu0 %v316
    %v318 = vpop.xlane.xlu0 %317
    %vm319 = vcmp.eq.f32.partialorder %v316, %v318
    %v320 = vsel %vm319, %v315, inf
    %321 = vmin.xlane.f32.xlu0 %v320
    %v322 = vpop.xlane.xlu0 %321
    %v323 = vcvt.f32.s32 %v322
    %v324 = vcvt.f32.s32 %v318
    %v325 = vshll.u32 %v324, 16
    %v326 = vadd.s32 %v325, %v323
    %v327 = vsel %vm233, %v311, 2147483647
    %v328 = vand.u32 %v327, 65535
    %v329 = vshra.s32 %v327, 16
    %v330 = vcvt.s32.f32 %v328
    %v331 = vcvt.s32.f32 %v329
    %332 = vmin.xlane.f32.xlu0 %v331
    %v333 = vpop.xlane.xlu0 %332
    %vm334 = vcmp.eq.f32.partialorder %v331, %v333
    %v335 = vsel %vm334, %v330, inf
    %336 = vmin.xlane.f32.xlu0 %v335
    %v337 = vpop.xlane.xlu0 %336
    %v338 = vcvt.f32.s32 %v337
    %v339 = vcvt.f32.s32 %v333
    %v340 = vshll.u32 %v339, 16
    %v341 = vadd.s32 %v340, %v338
    %vm342 = vcmp.eq.s32.totalorder %v257, %v326
    %vm343 = vcmp.eq.s32.totalorder %v257, %v341
    %vm344 = vmor %vm298, %vm342
    %vm345 = vmor %vm299, %vm343
    %v346 = vsel %vm342, -inf, %v300
    %v347 = vsel %vm343, -inf, %v301
    %v348 = vsel %vm233, %v346, -inf
    %349 = vmax.xlane.f32.xlu0 %v348
    %v350 = vpop.xlane.xlu0 %349
    %v351 = vsel %vm233, %v347, -inf
    %352 = vmax.xlane.f32.xlu0 %v351
    %v353 = vpop.xlane.xlu0 %352
    %vm354 = vcmp.eq.f32.partialorder %v346, %v350
    %vm355 = vcmp.eq.f32.partialorder %v347, %v353
    %v356 = vsel %vm354, %v257, 8
    %v357 = vsel %vm355, %v257, 8
    %v358 = vsel %vm233, %v356, 2147483647
    %v359 = vand.u32 %v358, 65535
    %v360 = vshra.s32 %v358, 16
    %v361 = vcvt.s32.f32 %v359
    %v362 = vcvt.s32.f32 %v360
    %363 = vmin.xlane.f32.xlu0 %v362
    %v364 = vpop.xlane.xlu0 %363
    %vm365 = vcmp.eq.f32.partialorder %v362, %v364
    %v366 = vsel %vm365, %v361, inf
    %367 = vmin.xlane.f32.xlu0 %v366
    %v368 = vpop.xlane.xlu0 %367
    %v369 = vcvt.f32.s32 %v368
    %v370 = vcvt.f32.s32 %v364
    %v371 = vshll.u32 %v370, 16
    %v372 = vadd.s32 %v371, %v369
    %v373 = vsel %vm233, %v357, 2147483647
    %v374 = vand.u32 %v373, 65535
    %v375 = vshra.s32 %v373, 16
    %v376 = vcvt.s32.f32 %v374
    %v377 = vcvt.s32.f32 %v375
    %378 = vmin.xlane.f32.xlu0 %v377
    %v379 = vpop.xlane.xlu0 %378
    %vm380 = vcmp.eq.f32.partialorder %v377, %v379
    %v381 = vsel %vm380, %v376, inf
    %382 = vmin.xlane.f32.xlu0 %v381
    %v383 = vpop.xlane.xlu0 %382
    %v384 = vcvt.f32.s32 %v383
    %v385 = vcvt.f32.s32 %v379
    %v386 = vshll.u32 %v385, 16
    %v387 = vadd.s32 %v386, %v384
    %vm388 = vcmp.eq.s32.totalorder %v257, %v372
    %vm389 = vcmp.eq.s32.totalorder %v257, %v387
    %vm390 = vmor %vm344, %vm388
    %vm391 = vmor %vm345, %vm389
    %v392 = vsel %vm390, %v254, 0.0
    %v393 = vsel %vm391, %v255, 0.0
    %v394 = vld [vmem:[%s5] sm:$0xff]
    %v395 = vld [vmem:[%s5 + $0x8] sm:$0xff]
    %v396 = vld [vmem:[%s5 + $0x10] sm:$0xff]
    %v397 = vld [vmem:[%s5 + $0x18] sm:$0xff]
    %v398 = vld [vmem:[%s5 + $0x20] sm:$0xff]
    %v399 = vld [vmem:[%s5 + $0x28] sm:$0xff]
    %v400 = vld [vmem:[%s5 + $0x30] sm:$0xff]
    %v401 = vld [vmem:[%s5 + $0x38] sm:$0xff]
    %v402 = vld [vmem:[%s5 + $0x40] sm:$0xff]
    %v403 = vld [vmem:[%s5 + $0x48] sm:$0xff]
    %v404 = vld [vmem:[%s5 + $0x50] sm:$0xff]
    %v405 = vld [vmem:[%s5 + $0x58] sm:$0xff]
    %v406 = vld [vmem:[%s5 + $0x60] sm:$0xff]
    %v407 = vld [vmem:[%s5 + $0x68] sm:$0xff]
    %v408 = vld [vmem:[%s5 + $0x70] sm:$0xff]
    %v409 = vld [vmem:[%s5 + $0x78] sm:$0xff]
    %v410 = vld [vmem:[%s6] sm:$0xf]
    %v412 = vlaneseq
    %v413 = vshrl.u32 %v412, 7
    %v414 = vsub.s32 0, %v413
    %v415 = vrot.slane %v410, %v414
    %v416 = vlaneseq
    %v417 = vshrl.u32 %v416, 7
    %v418 = vsub.s32 1, %v417
    %v419 = vrot.slane %v410, %v418
    %v420 = vlaneseq
    %v421 = vshrl.u32 %v420, 7
    %v422 = vsub.s32 2, %v421
    %v423 = vrot.slane %v410, %v422
    %v424 = vlaneseq
    %v425 = vshrl.u32 %v424, 7
    %v426 = vsub.s32 3, %v425
    %v427 = vrot.slane %v410, %v426
    %432 = vmatprep.subr.mxu0 0.0
    %433 = vmatpush1.msra.mxu0 0.0
    %434 = vmatprep.subr.mxu0 0.0
    %435 = vmatpush1.msra.mxu0 0.0
    %436 = vmatprep.subr.mxu0 0.0
    %437 = vmatpush1.msra.mxu0 0.0
    %438 = vmatprep.subr.mxu0 0.0
    %439 = vmatpush1.msra.mxu0 0.0
    %440 = vmatprep.subr.mxu0 0.0
    %441 = vmatpush1.msra.mxu0 0.0
    %442 = vmatprep.subr.mxu0 0.0
    %443 = vmatpush1.msra.mxu0 0.0
    %444 = vmatprep.subr.mxu0 0.0
    %445 = vmatpush1.msra.mxu0 0.0
    %446 = vmatprep.subr.mxu0 0.0
    %447 = vmatpush1.msra.mxu0 0.0
    %448 = vmatprep.subr.mxu0 0.0
    %449 = vmatpush1.msra.mxu0 0.0
    %450 = vmatprep.subr.mxu0 0.0
    %451 = vmatpush1.msra.mxu0 0.0
    %452 = vmatprep.subr.mxu0 0.0
    %453 = vmatpush1.msra.mxu0 0.0
    %454 = vmatprep.subr.mxu0 0.0
    %455 = vmatpush1.msra.mxu0 0.0
    %456 = vmatprep.subr.mxu0 %v407
    %457 = vmatpush1.msra.mxu0 %v406
    %458 = vmatprep.subr.mxu0 %v403
    %459 = vmatpush1.msra.mxu0 %v402
    %460 = vmatprep.subr.mxu0 %v399
    %461 = vmatpush1.msra.mxu0 %v398
    %462 = vmatprep.subr.mxu0 %v395
    %463 = vmatpush1.msra.mxu0 %v394
    %464 = vmatprep.subr.mxu0 0.0
    %465 = vmatpush2.msra.mxu0 0.0
    %466 = vmatprep.subr.mxu0 0.0
    %467 = vmatpush2.msra.mxu0 0.0
    %468 = vmatprep.subr.mxu0 0.0
    %469 = vmatpush2.msra.mxu0 0.0
    %470 = vmatprep.subr.mxu0 0.0
    %471 = vmatpush2.msra.mxu0 0.0
    %472 = vmatprep.subr.mxu0 0.0
    %473 = vmatpush2.msra.mxu0 0.0
    %474 = vmatprep.subr.mxu0 0.0
    %475 = vmatpush2.msra.mxu0 0.0
    %476 = vmatprep.subr.mxu0 0.0
    %477 = vmatpush2.msra.mxu0 0.0
    %478 = vmatprep.subr.mxu0 0.0
    %479 = vmatpush2.msra.mxu0 0.0
    %480 = vmatprep.subr.mxu0 0.0
    %481 = vmatpush2.msra.mxu0 0.0
    %482 = vmatprep.subr.mxu0 0.0
    %483 = vmatpush2.msra.mxu0 0.0
    %484 = vmatprep.subr.mxu0 0.0
    %485 = vmatpush2.msra.mxu0 0.0
    %486 = vmatprep.subr.mxu0 0.0
    %487 = vmatpush2.msra.mxu0 0.0
    %488 = vmatprep.subr.mxu0 0.0
    %489 = vmatpush2.msra.mxu0 0.0
    %490 = vmatprep.subr.mxu0 0.0
    %491 = vmatpush2.msra.mxu0 0.0
    %492 = vmatprep.subr.mxu0 0.0
    %493 = vmatpush2.msra.mxu0 0.0
    %494 = vmatprep.subr.mxu0 0.0
    %495 = vmatpush2.msra.mxu0 0.0
    %496 = vmatprep.mubr.f32.mxu0 0.0
    %497 = vmatmul.mubr.f32.gmra.mxu0 %v54
    %v498 = vpop.f32.mrf.mxu0
    %v499 = vadd.f32 %v415, %v498
    %v500 = vpop.f32.mrf.mxu0
    %v501 = vadd.f32 %v419, %v500
    %502 = vmatprep.mubr.f32.mxu0 0.0
    %503 = vmatmul.mubr.f32.gmra.mxu0 %v57
    %v504 = vpop.f32.mrf.mxu0
    %v505 = vadd.f32 %v415, %v504
    %v506 = vpop.f32.mrf.mxu0
    %v507 = vadd.f32 %v419, %v506
    %508 = vdwg.mxu0
    %509 = vmatprep.subr.mxu0 0.0
    %510 = vmatpush1.msra.mxu0 0.0
    %511 = vmatprep.subr.mxu0 0.0
    %512 = vmatpush1.msra.mxu0 0.0
    %513 = vmatprep.subr.mxu0 0.0
    %514 = vmatpush1.msra.mxu0 0.0
    %515 = vmatprep.subr.mxu0 0.0
    %516 = vmatpush1.msra.mxu0 0.0
    %517 = vmatprep.subr.mxu0 0.0
    %518 = vmatpush1.msra.mxu0 0.0
    %519 = vmatprep.subr.mxu0 0.0
    %520 = vmatpush1.msra.mxu0 0.0
    %521 = vmatprep.subr.mxu0 0.0
    %522 = vmatpush1.msra.mxu0 0.0
    %523 = vmatprep.subr.mxu0 0.0
    %524 = vmatpush1.msra.mxu0 0.0
    %525 = vmatprep.subr.mxu0 0.0
    %526 = vmatpush1.msra.mxu0 0.0
    %527 = vmatprep.subr.mxu0 0.0
    %528 = vmatpush1.msra.mxu0 0.0
    %529 = vmatprep.subr.mxu0 0.0
    %530 = vmatpush1.msra.mxu0 0.0
    %531 = vmatprep.subr.mxu0 0.0
    %532 = vmatpush1.msra.mxu0 0.0
    %533 = vmatprep.subr.mxu0 %v409
    %534 = vmatpush1.msra.mxu0 %v408
    %535 = vmatprep.subr.mxu0 %v405
    %536 = vmatpush1.msra.mxu0 %v404
    %537 = vmatprep.subr.mxu0 %v401
    %538 = vmatpush1.msra.mxu0 %v400
    %539 = vmatprep.subr.mxu0 %v397
    %540 = vmatpush1.msra.mxu0 %v396
    %541 = vmatprep.subr.mxu0 0.0
    %542 = vmatpush2.msra.mxu0 0.0
    %543 = vmatprep.subr.mxu0 0.0
    %544 = vmatpush2.msra.mxu0 0.0
    %545 = vmatprep.subr.mxu0 0.0
    %546 = vmatpush2.msra.mxu0 0.0
    %547 = vmatprep.subr.mxu0 0.0
    %548 = vmatpush2.msra.mxu0 0.0
    %549 = vmatprep.subr.mxu0 0.0
    %550 = vmatpush2.msra.mxu0 0.0
    %551 = vmatprep.subr.mxu0 0.0
    %552 = vmatpush2.msra.mxu0 0.0
    %553 = vmatprep.subr.mxu0 0.0
    %554 = vmatpush2.msra.mxu0 0.0
    %555 = vmatprep.subr.mxu0 0.0
    %556 = vmatpush2.msra.mxu0 0.0
    %557 = vmatprep.subr.mxu0 0.0
    %558 = vmatpush2.msra.mxu0 0.0
    %559 = vmatprep.subr.mxu0 0.0
    %560 = vmatpush2.msra.mxu0 0.0
    %561 = vmatprep.subr.mxu0 0.0
    %562 = vmatpush2.msra.mxu0 0.0
    %563 = vmatprep.subr.mxu0 0.0
    %564 = vmatpush2.msra.mxu0 0.0
    %565 = vmatprep.subr.mxu0 0.0
    %566 = vmatpush2.msra.mxu0 0.0
    %567 = vmatprep.subr.mxu0 0.0
    %568 = vmatpush2.msra.mxu0 0.0
    %569 = vmatprep.subr.mxu0 0.0
    %570 = vmatpush2.msra.mxu0 0.0
    %571 = vmatprep.subr.mxu0 0.0
    %572 = vmatpush2.msra.mxu0 0.0
    %573 = vmatprep.mubr.f32.mxu0 0.0
    %574 = vmatmul.mubr.f32.gmra.mxu0 %v54
    %v575 = vpop.f32.mrf.mxu0
    %v576 = vadd.f32 %v423, %v575
    %v577 = vpop.f32.mrf.mxu0
    %v578 = vadd.f32 %v427, %v577
    %579 = vmatprep.mubr.f32.mxu0 0.0
    %580 = vmatmul.mubr.f32.gmra.mxu0 %v57
    %v581 = vpop.f32.mrf.mxu0
    %v582 = vadd.f32 %v423, %v581
    %v583 = vpop.f32.mrf.mxu0
    %v584 = vadd.f32 %v427, %v583
    %585 = vdwg.mxu0
    %v586 = vmax.f32 %v499, 0.0
    %v587 = vmax.f32 %v501, 0.0
    %v588 = vmax.f32 %v576, 0.0
    %v589 = vmax.f32 %v578, 0.0
    %v590 = vmax.f32 %v505, 0.0
    %v591 = vmax.f32 %v507, 0.0
    %v592 = vmax.f32 %v582, 0.0
    %v593 = vmax.f32 %v584, 0.0
    %v594 = vld [vmem:[%s9] sm:$0xff]
    %v595 = vld [vmem:[%s9 + $0x8] sm:$0xff]
    %v596 = vld [vmem:[%s9 + $0x10] sm:$0xff]
    %v597 = vld [vmem:[%s9 + $0x18] sm:$0xff]
    %v599 = vsel %vm233, %v392, 0
    %v602 = vsel %vm233, %v393, 0
    %604 = vmatprep.subr.mxu0 0.0
    %605 = vmatpush1.msra.mxu0 0.0
    %606 = vmatprep.subr.mxu0 0.0
    %607 = vmatpush1.msra.mxu0 0.0
    %608 = vmatprep.subr.mxu0 0.0
    %609 = vmatpush1.msra.mxu0 0.0
    %610 = vmatprep.subr.mxu0 0.0
    %611 = vmatpush1.msra.mxu0 0.0
    %612 = vmatprep.subr.mxu0 0.0
    %613 = vmatpush1.msra.mxu0 0.0
    %614 = vmatprep.subr.mxu0 0.0
    %615 = vmatpush1.msra.mxu0 0.0
    %616 = vmatprep.subr.mxu0 0.0
    %617 = vmatpush1.msra.mxu0 0.0
    %618 = vmatprep.subr.mxu0 0.0
    %619 = vmatpush1.msra.mxu0 0.0
    %620 = vmatprep.subr.mxu0 0.0
    %621 = vmatpush1.msra.mxu0 0.0
    %622 = vmatprep.subr.mxu0 0.0
    %623 = vmatpush1.msra.mxu0 0.0
    %624 = vmatprep.subr.mxu0 0.0
    %625 = vmatpush1.msra.mxu0 0.0
    %626 = vmatprep.subr.mxu0 0.0
    %627 = vmatpush1.msra.mxu0 0.0
    %628 = vmatprep.subr.mxu0 0.0
    %629 = vmatpush1.msra.mxu0 0.0
    %630 = vmatprep.subr.mxu0 0.0
    %631 = vmatpush1.msra.mxu0 0.0
    %632 = vmatprep.subr.mxu0 0.0
    %633 = vmatpush1.msra.mxu0 0.0
    %634 = vmatprep.subr.mxu0 %v595
    %635 = vmatpush1.msra.mxu0 %v594
    %636 = vmatprep.subr.mxu0 0.0
    %637 = vmatpush2.msra.mxu0 0.0
    %638 = vmatprep.subr.mxu0 0.0
    %639 = vmatpush2.msra.mxu0 0.0
    %640 = vmatprep.subr.mxu0 0.0
    %641 = vmatpush2.msra.mxu0 0.0
    %642 = vmatprep.subr.mxu0 0.0
    %643 = vmatpush2.msra.mxu0 0.0
    %644 = vmatprep.subr.mxu0 0.0
    %645 = vmatpush2.msra.mxu0 0.0
    %646 = vmatprep.subr.mxu0 0.0
    %647 = vmatpush2.msra.mxu0 0.0
    %648 = vmatprep.subr.mxu0 0.0
    %649 = vmatpush2.msra.mxu0 0.0
    %650 = vmatprep.subr.mxu0 0.0
    %651 = vmatpush2.msra.mxu0 0.0
    %652 = vmatprep.subr.mxu0 0.0
    %653 = vmatpush2.msra.mxu0 0.0
    %654 = vmatprep.subr.mxu0 0.0
    %655 = vmatpush2.msra.mxu0 0.0
    %656 = vmatprep.subr.mxu0 0.0
    %657 = vmatpush2.msra.mxu0 0.0
    %658 = vmatprep.subr.mxu0 0.0
    %659 = vmatpush2.msra.mxu0 0.0
    %660 = vmatprep.subr.mxu0 0.0
    %661 = vmatpush2.msra.mxu0 0.0
    %662 = vmatprep.subr.mxu0 0.0
    %663 = vmatpush2.msra.mxu0 0.0
    %664 = vmatprep.subr.mxu0 0.0
    %665 = vmatpush2.msra.mxu0 0.0
    %666 = vmatprep.subr.mxu0 0.0
    %667 = vmatpush2.msra.mxu0 0.0
    %668 = vmatprep.mubr.f32.mxu0 0.0
    %669 = vmatmul.mubr.f32.gmra.mxu0 %v599
    %v670 = vpop.f32.mrf.mxu0
    %v671 = vadd.f32 0.0, %v670
    %v672 = vpop.f32.mrf.mxu0
    %v673 = vadd.f32 0.0, %v672
    %674 = vmatprep.mubr.f32.mxu0 0.0
    %675 = vmatmul.mubr.f32.gmra.mxu0 %v602
    %v676 = vpop.f32.mrf.mxu0
    %v677 = vadd.f32 0.0, %v676
    %v678 = vpop.f32.mrf.mxu0
    %v679 = vadd.f32 0.0, %v678
    %680 = vdwg.mxu0
    %681 = vmatprep.subr.mxu0 0.0
    %682 = vmatpush1.msra.mxu0 0.0
    %683 = vmatprep.subr.mxu0 0.0
    %684 = vmatpush1.msra.mxu0 0.0
    %685 = vmatprep.subr.mxu0 0.0
    %686 = vmatpush1.msra.mxu0 0.0
    %687 = vmatprep.subr.mxu0 0.0
    %688 = vmatpush1.msra.mxu0 0.0
    %689 = vmatprep.subr.mxu0 0.0
    %690 = vmatpush1.msra.mxu0 0.0
    %691 = vmatprep.subr.mxu0 0.0
    %692 = vmatpush1.msra.mxu0 0.0
    %693 = vmatprep.subr.mxu0 0.0
    %694 = vmatpush1.msra.mxu0 0.0
    %695 = vmatprep.subr.mxu0 0.0
    %696 = vmatpush1.msra.mxu0 0.0
    %697 = vmatprep.subr.mxu0 0.0
    %698 = vmatpush1.msra.mxu0 0.0
    %699 = vmatprep.subr.mxu0 0.0
    %700 = vmatpush1.msra.mxu0 0.0
    %701 = vmatprep.subr.mxu0 0.0
    %702 = vmatpush1.msra.mxu0 0.0
    %703 = vmatprep.subr.mxu0 0.0
    %704 = vmatpush1.msra.mxu0 0.0
    %705 = vmatprep.subr.mxu0 0.0
    %706 = vmatpush1.msra.mxu0 0.0
    %707 = vmatprep.subr.mxu0 0.0
    %708 = vmatpush1.msra.mxu0 0.0
    %709 = vmatprep.subr.mxu0 0.0
    %710 = vmatpush1.msra.mxu0 0.0
    %711 = vmatprep.subr.mxu0 %v597
    %712 = vmatpush1.msra.mxu0 %v596
    %713 = vmatprep.subr.mxu0 0.0
    %714 = vmatpush2.msra.mxu0 0.0
    %715 = vmatprep.subr.mxu0 0.0
    %716 = vmatpush2.msra.mxu0 0.0
    %717 = vmatprep.subr.mxu0 0.0
    %718 = vmatpush2.msra.mxu0 0.0
    %719 = vmatprep.subr.mxu0 0.0
    %720 = vmatpush2.msra.mxu0 0.0
    %721 = vmatprep.subr.mxu0 0.0
    %722 = vmatpush2.msra.mxu0 0.0
    %723 = vmatprep.subr.mxu0 0.0
    %724 = vmatpush2.msra.mxu0 0.0
    %725 = vmatprep.subr.mxu0 0.0
    %726 = vmatpush2.msra.mxu0 0.0
    %727 = vmatprep.subr.mxu0 0.0
    %728 = vmatpush2.msra.mxu0 0.0
    %729 = vmatprep.subr.mxu0 0.0
    %730 = vmatpush2.msra.mxu0 0.0
    %731 = vmatprep.subr.mxu0 0.0
    %732 = vmatpush2.msra.mxu0 0.0
    %733 = vmatprep.subr.mxu0 0.0
    %734 = vmatpush2.msra.mxu0 0.0
    %735 = vmatprep.subr.mxu0 0.0
    %736 = vmatpush2.msra.mxu0 0.0
    %737 = vmatprep.subr.mxu0 0.0
    %738 = vmatpush2.msra.mxu0 0.0
    %739 = vmatprep.subr.mxu0 0.0
    %740 = vmatpush2.msra.mxu0 0.0
    %741 = vmatprep.subr.mxu0 0.0
    %742 = vmatpush2.msra.mxu0 0.0
    %743 = vmatprep.subr.mxu0 0.0
    %744 = vmatpush2.msra.mxu0 0.0
    %745 = vmatprep.mubr.f32.mxu0 0.0
    %746 = vmatmul.mubr.f32.gmra.mxu0 %v599
    %v747 = vpop.f32.mrf.mxu0
    %v748 = vadd.f32 0.0, %v747
    %v749 = vpop.f32.mrf.mxu0
    %v750 = vadd.f32 0.0, %v749
    %751 = vmatprep.mubr.f32.mxu0 0.0
    %752 = vmatmul.mubr.f32.gmra.mxu0 %v602
    %v753 = vpop.f32.mrf.mxu0
    %v754 = vadd.f32 0.0, %v753
    %v755 = vpop.f32.mrf.mxu0
    %v756 = vadd.f32 0.0, %v755
    %757 = vdwg.mxu0
    %v758 = vmul.f32 %v586, %v671
    %v759 = vmul.f32 %v587, %v673
    %v760 = vmul.f32 %v588, %v748
    %v761 = vmul.f32 %v589, %v750
    %v762 = vmul.f32 %v590, %v677
    %v763 = vmul.f32 %v591, %v679
    %v764 = vmul.f32 %v592, %v754
    %v765 = vmul.f32 %v593, %v756
    %v766 = vld [vmem:[%s7] sm:$0xff]
    %v767 = vld [vmem:[%s7 + $0x8] sm:$0xff]
    %v768 = vld [vmem:[%s7 + $0x10] sm:$0xff]
    %v769 = vld [vmem:[%s7 + $0x18] sm:$0xff]
    %v770 = vld [vmem:[%s7 + $0x20] sm:$0xff]
    %v771 = vld [vmem:[%s7 + $0x28] sm:$0xff]
    %v772 = vld [vmem:[%s7 + $0x30] sm:$0xff]
    %v773 = vld [vmem:[%s7 + $0x38] sm:$0xff]
    %v774 = vld [vmem:[%s7 + $0x40] sm:$0xff]
    %v775 = vld [vmem:[%s7 + $0x48] sm:$0xff]
    %v776 = vld [vmem:[%s7 + $0x50] sm:$0xff]
    %v777 = vld [vmem:[%s7 + $0x58] sm:$0xff]
    %v778 = vld [vmem:[%s7 + $0x60] sm:$0xff]
    %v779 = vld [vmem:[%s7 + $0x68] sm:$0xff]
    %v780 = vld [vmem:[%s7 + $0x70] sm:$0xff]
    %v781 = vld [vmem:[%s7 + $0x78] sm:$0xff]
    %v782 = vld [vmem:[%s7 + $0x80] sm:$0xff]
    %v783 = vld [vmem:[%s7 + $0x88] sm:$0xff]
    %v784 = vld [vmem:[%s7 + $0x90] sm:$0xff]
    %v785 = vld [vmem:[%s7 + $0x98] sm:$0xff]
    %v786 = vld [vmem:[%s7 + $0xa0] sm:$0xff]
    %v787 = vld [vmem:[%s7 + $0xa8] sm:$0xff]
    %v788 = vld [vmem:[%s7 + $0xb0] sm:$0xff]
    %v789 = vld [vmem:[%s7 + $0xb8] sm:$0xff]
    %v790 = vld [vmem:[%s7 + $0xc0] sm:$0xff]
    %v791 = vld [vmem:[%s7 + $0xc8] sm:$0xff]
    %v792 = vld [vmem:[%s7 + $0xd0] sm:$0xff]
    %v793 = vld [vmem:[%s7 + $0xd8] sm:$0xff]
    %v794 = vld [vmem:[%s7 + $0xe0] sm:$0xff]
    %v795 = vld [vmem:[%s7 + $0xe8] sm:$0xff]
    %v796 = vld [vmem:[%s7 + $0xf0] sm:$0xff]
    %v797 = vld [vmem:[%s7 + $0xf8] sm:$0xff]
    %v798 = vld [vmem:[%s7 + $0x100] sm:$0xff]
    %v799 = vld [vmem:[%s7 + $0x108] sm:$0xff]
    %v800 = vld [vmem:[%s7 + $0x110] sm:$0xff]
    %v801 = vld [vmem:[%s7 + $0x118] sm:$0xff]
    %v802 = vld [vmem:[%s7 + $0x120] sm:$0xff]
    %v803 = vld [vmem:[%s7 + $0x128] sm:$0xff]
    %v804 = vld [vmem:[%s7 + $0x130] sm:$0xff]
    %v805 = vld [vmem:[%s7 + $0x138] sm:$0xff]
    %v806 = vld [vmem:[%s7 + $0x140] sm:$0xff]
    %v807 = vld [vmem:[%s7 + $0x148] sm:$0xff]
    %v808 = vld [vmem:[%s7 + $0x150] sm:$0xff]
    %v809 = vld [vmem:[%s7 + $0x158] sm:$0xff]
    %v810 = vld [vmem:[%s7 + $0x160] sm:$0xff]
    %v811 = vld [vmem:[%s7 + $0x168] sm:$0xff]
    %v812 = vld [vmem:[%s7 + $0x170] sm:$0xff]
    %v813 = vld [vmem:[%s7 + $0x178] sm:$0xff]
    %v814 = vld [vmem:[%s7 + $0x180] sm:$0xff]
    %v815 = vld [vmem:[%s7 + $0x188] sm:$0xff]
    %v816 = vld [vmem:[%s7 + $0x190] sm:$0xff]
    %v817 = vld [vmem:[%s7 + $0x198] sm:$0xff]
    %v818 = vld [vmem:[%s7 + $0x1a0] sm:$0xff]
    %v819 = vld [vmem:[%s7 + $0x1a8] sm:$0xff]
    %v820 = vld [vmem:[%s7 + $0x1b0] sm:$0xff]
    %v821 = vld [vmem:[%s7 + $0x1b8] sm:$0xff]
    %v822 = vld [vmem:[%s7 + $0x1c0] sm:$0xff]
    %v823 = vld [vmem:[%s7 + $0x1c8] sm:$0xff]
    %v824 = vld [vmem:[%s7 + $0x1d0] sm:$0xff]
    %v825 = vld [vmem:[%s7 + $0x1d8] sm:$0xff]
    %v826 = vld [vmem:[%s7 + $0x1e0] sm:$0xff]
    %v827 = vld [vmem:[%s7 + $0x1e8] sm:$0xff]
    %v828 = vld [vmem:[%s7 + $0x1f0] sm:$0xff]
    %v829 = vld [vmem:[%s7 + $0x1f8] sm:$0xff]
    %v830 = vld [vmem:[%s8] sm:$0xff]
    %831 = vmatprep.subr.mxu0 0.0
    %832 = vmatpush1.msra.mxu0 0.0
    %833 = vmatprep.subr.mxu0 0.0
    %834 = vmatpush1.msra.mxu0 0.0
    %835 = vmatprep.subr.mxu0 0.0
    %836 = vmatpush1.msra.mxu0 0.0
    %837 = vmatprep.subr.mxu0 0.0
    %838 = vmatpush1.msra.mxu0 0.0
    %839 = vmatprep.subr.mxu0 0.0
    %840 = vmatpush1.msra.mxu0 0.0
    %841 = vmatprep.subr.mxu0 0.0
    %842 = vmatpush1.msra.mxu0 0.0
    %843 = vmatprep.subr.mxu0 0.0
    %844 = vmatpush1.msra.mxu0 0.0
    %845 = vmatprep.subr.mxu0 0.0
    %846 = vmatpush1.msra.mxu0 0.0
    %847 = vmatprep.subr.mxu0 0.0
    %848 = vmatpush1.msra.mxu0 0.0
    %849 = vmatprep.subr.mxu0 0.0
    %850 = vmatpush1.msra.mxu0 0.0
    %851 = vmatprep.subr.mxu0 0.0
    %852 = vmatpush1.msra.mxu0 0.0
    %853 = vmatprep.subr.mxu0 0.0
    %854 = vmatpush1.msra.mxu0 0.0
    %855 = vmatprep.subr.mxu0 0.0
    %856 = vmatpush1.msra.mxu0 0.0
    %857 = vmatprep.subr.mxu0 0.0
    %858 = vmatpush1.msra.mxu0 0.0
    %859 = vmatprep.subr.mxu0 0.0
    %860 = vmatpush1.msra.mxu0 0.0
    %861 = vmatprep.subr.mxu0 0.0
    %862 = vmatpush1.msra.mxu0 %v830
    %863 = vmatprep.subr.mxu0 0.0
    %864 = vmatpush2.msra.mxu0 0.0
    %865 = vmatprep.subr.mxu0 0.0
    %866 = vmatpush2.msra.mxu0 0.0
    %867 = vmatprep.subr.mxu0 0.0
    %868 = vmatpush2.msra.mxu0 0.0
    %869 = vmatprep.subr.mxu0 0.0
    %870 = vmatpush2.msra.mxu0 0.0
    %871 = vmatprep.subr.mxu0 0.0
    %872 = vmatpush2.msra.mxu0 0.0
    %873 = vmatprep.subr.mxu0 0.0
    %874 = vmatpush2.msra.mxu0 0.0
    %875 = vmatprep.subr.mxu0 0.0
    %876 = vmatpush2.msra.mxu0 0.0
    %877 = vmatprep.subr.mxu0 0.0
    %878 = vmatpush2.msra.mxu0 0.0
    %879 = vmatprep.subr.mxu0 0.0
    %880 = vmatpush2.msra.mxu0 0.0
    %881 = vmatprep.subr.mxu0 0.0
    %882 = vmatpush2.msra.mxu0 0.0
    %883 = vmatprep.subr.mxu0 0.0
    %884 = vmatpush2.msra.mxu0 0.0
    %885 = vmatprep.subr.mxu0 0.0
    %886 = vmatpush2.msra.mxu0 0.0
    %887 = vmatprep.subr.mxu0 0.0
    %888 = vmatpush2.msra.mxu0 0.0
    %889 = vmatprep.subr.mxu0 0.0
    %890 = vmatpush2.msra.mxu0 0.0
    %891 = vmatprep.subr.mxu0 0.0
    %892 = vmatpush2.msra.mxu0 0.0
    %893 = vmatprep.subr.mxu0 0.0
    %894 = vmatpush2.msra.mxu0 0.0
    %895 = vmatprep.mubr.f32.mxu0 0.0
    %896 = vmatmul.mubr.f32.gmra.mxu0 %v599
    %v897 = vpop.f32.mrf.mxu0
    %v898 = vadd.f32 0.0, %v897
    %v899 = vpop.f32.mrf.mxu0
    %900 = vmatprep.mubr.f32.mxu0 0.0
    %901 = vmatmul.mubr.f32.gmra.mxu0 %v602
    %v902 = vpop.f32.mrf.mxu0
    %v903 = vadd.f32 0.0, %v902
    %v904 = vpop.f32.mrf.mxu0
    %905 = vdwg.mxu0
    %906 = vmatprep.subr.mxu0 0.0
    %907 = vmatpush1.msra.mxu0 %v781
    %908 = vmatprep.subr.mxu0 0.0
    %909 = vmatpush1.msra.mxu0 %v780
    %910 = vmatprep.subr.mxu0 0.0
    %911 = vmatpush1.msra.mxu0 %v779
    %912 = vmatprep.subr.mxu0 0.0
    %913 = vmatpush1.msra.mxu0 %v778
    %914 = vmatprep.subr.mxu0 0.0
    %915 = vmatpush1.msra.mxu0 %v777
    %916 = vmatprep.subr.mxu0 0.0
    %917 = vmatpush1.msra.mxu0 %v776
    %918 = vmatprep.subr.mxu0 0.0
    %919 = vmatpush1.msra.mxu0 %v775
    %920 = vmatprep.subr.mxu0 0.0
    %921 = vmatpush1.msra.mxu0 %v774
    %922 = vmatprep.subr.mxu0 0.0
    %923 = vmatpush1.msra.mxu0 %v773
    %924 = vmatprep.subr.mxu0 0.0
    %925 = vmatpush1.msra.mxu0 %v772
    %926 = vmatprep.subr.mxu0 0.0
    %927 = vmatpush1.msra.mxu0 %v771
    %928 = vmatprep.subr.mxu0 0.0
    %929 = vmatpush1.msra.mxu0 %v770
    %930 = vmatprep.subr.mxu0 0.0
    %931 = vmatpush1.msra.mxu0 %v769
    %932 = vmatprep.subr.mxu0 0.0
    %933 = vmatpush1.msra.mxu0 %v768
    %934 = vmatprep.subr.mxu0 0.0
    %935 = vmatpush1.msra.mxu0 %v767
    %936 = vmatprep.subr.mxu0 0.0
    %937 = vmatpush1.msra.mxu0 %v766
    %938 = vmatprep.subr.mxu0 0.0
    %939 = vmatpush2.msra.mxu0 %v797
    %940 = vmatprep.subr.mxu0 0.0
    %941 = vmatpush2.msra.mxu0 %v796
    %942 = vmatprep.subr.mxu0 0.0
    %943 = vmatpush2.msra.mxu0 %v795
    %944 = vmatprep.subr.mxu0 0.0
    %945 = vmatpush2.msra.mxu0 %v794
    %946 = vmatprep.subr.mxu0 0.0
    %947 = vmatpush2.msra.mxu0 %v793
    %948 = vmatprep.subr.mxu0 0.0
    %949 = vmatpush2.msra.mxu0 %v792
    %950 = vmatprep.subr.mxu0 0.0
    %951 = vmatpush2.msra.mxu0 %v791
    %952 = vmatprep.subr.mxu0 0.0
    %953 = vmatpush2.msra.mxu0 %v790
    %954 = vmatprep.subr.mxu0 0.0
    %955 = vmatpush2.msra.mxu0 %v789
    %956 = vmatprep.subr.mxu0 0.0
    %957 = vmatpush2.msra.mxu0 %v788
    %958 = vmatprep.subr.mxu0 0.0
    %959 = vmatpush2.msra.mxu0 %v787
    %960 = vmatprep.subr.mxu0 0.0
    %961 = vmatpush2.msra.mxu0 %v786
    %962 = vmatprep.subr.mxu0 0.0
    %963 = vmatpush2.msra.mxu0 %v785
    %964 = vmatprep.subr.mxu0 0.0
    %965 = vmatpush2.msra.mxu0 %v784
    %966 = vmatprep.subr.mxu0 0.0
    %967 = vmatpush2.msra.mxu0 %v783
    %968 = vmatprep.subr.mxu0 0.0
    %969 = vmatpush2.msra.mxu0 %v782
    %970 = vmatprep.mubr.f32.mxu0 %v759
    %971 = vmatmul.mubr.f32.gmra.mxu0 %v758
    %v972 = vpop.f32.mrf.mxu0
    %v973 = vadd.f32 %v898, %v972
    %v974 = vpop.f32.mrf.mxu0
    %975 = vmatprep.mubr.f32.mxu0 %v763
    %976 = vmatmul.mubr.f32.gmra.mxu0 %v762
    %v977 = vpop.f32.mrf.mxu0
    %v978 = vadd.f32 %v903, %v977
    %v979 = vpop.f32.mrf.mxu0
    %980 = vdwg.mxu0
    %981 = vmatprep.subr.mxu0 0.0
    %982 = vmatpush1.msra.mxu0 %v813
    %983 = vmatprep.subr.mxu0 0.0
    %984 = vmatpush1.msra.mxu0 %v812
    %985 = vmatprep.subr.mxu0 0.0
    %986 = vmatpush1.msra.mxu0 %v811
    %987 = vmatprep.subr.mxu0 0.0
    %988 = vmatpush1.msra.mxu0 %v810
    %989 = vmatprep.subr.mxu0 0.0
    %990 = vmatpush1.msra.mxu0 %v809
    %991 = vmatprep.subr.mxu0 0.0
    %992 = vmatpush1.msra.mxu0 %v808
    %993 = vmatprep.subr.mxu0 0.0
    %994 = vmatpush1.msra.mxu0 %v807
    %995 = vmatprep.subr.mxu0 0.0
    %996 = vmatpush1.msra.mxu0 %v806
    %997 = vmatprep.subr.mxu0 0.0
    %998 = vmatpush1.msra.mxu0 %v805
    %999 = vmatprep.subr.mxu0 0.0
    %1000 = vmatpush1.msra.mxu0 %v804
    %1001 = vmatprep.subr.mxu0 0.0
    %1002 = vmatpush1.msra.mxu0 %v803
    %1003 = vmatprep.subr.mxu0 0.0
    %1004 = vmatpush1.msra.mxu0 %v802
    %1005 = vmatprep.subr.mxu0 0.0
    %1006 = vmatpush1.msra.mxu0 %v801
    %1007 = vmatprep.subr.mxu0 0.0
    %1008 = vmatpush1.msra.mxu0 %v800
    %1009 = vmatprep.subr.mxu0 0.0
    %1010 = vmatpush1.msra.mxu0 %v799
    %1011 = vmatprep.subr.mxu0 0.0
    %1012 = vmatpush1.msra.mxu0 %v798
    %1013 = vmatprep.subr.mxu0 0.0
    %1014 = vmatpush2.msra.mxu0 %v829
    %1015 = vmatprep.subr.mxu0 0.0
    %1016 = vmatpush2.msra.mxu0 %v828
    %1017 = vmatprep.subr.mxu0 0.0
    %1018 = vmatpush2.msra.mxu0 %v827
    %1019 = vmatprep.subr.mxu0 0.0
    %1020 = vmatpush2.msra.mxu0 %v826
    %1021 = vmatprep.subr.mxu0 0.0
    %1022 = vmatpush2.msra.mxu0 %v825
    %1023 = vmatprep.subr.mxu0 0.0
    %1024 = vmatpush2.msra.mxu0 %v824
    %1025 = vmatprep.subr.mxu0 0.0
    %1026 = vmatpush2.msra.mxu0 %v823
    %1027 = vmatprep.subr.mxu0 0.0
    %1028 = vmatpush2.msra.mxu0 %v822
    %1029 = vmatprep.subr.mxu0 0.0
    %1030 = vmatpush2.msra.mxu0 %v821
    %1031 = vmatprep.subr.mxu0 0.0
    %1032 = vmatpush2.msra.mxu0 %v820
    %1033 = vmatprep.subr.mxu0 0.0
    %1034 = vmatpush2.msra.mxu0 %v819
    %1035 = vmatprep.subr.mxu0 0.0
    %1036 = vmatpush2.msra.mxu0 %v818
    %1037 = vmatprep.subr.mxu0 0.0
    %1038 = vmatpush2.msra.mxu0 %v817
    %1039 = vmatprep.subr.mxu0 0.0
    %1040 = vmatpush2.msra.mxu0 %v816
    %1041 = vmatprep.subr.mxu0 0.0
    %1042 = vmatpush2.msra.mxu0 %v815
    %1043 = vmatprep.subr.mxu0 0.0
    %1044 = vmatpush2.msra.mxu0 %v814
    %1045 = vmatprep.mubr.f32.mxu0 %v761
    %1046 = vmatmul.mubr.f32.gmra.mxu0 %v760
    %v1047 = vpop.f32.mrf.mxu0
    %v1048 = vadd.f32 %v973, %v1047
    %v1049 = vpop.f32.mrf.mxu0
    %1050 = vmatprep.mubr.f32.mxu0 %v765
    %1051 = vmatmul.mubr.f32.gmra.mxu0 %v764
    %v1052 = vpop.f32.mrf.mxu0
    %v1053 = vadd.f32 %v978, %v1052
    %v1054 = vpop.f32.mrf.mxu0
    %1055 = vdwg.mxu0
    %v1056 = vld [vmem:[%s10] sm:$0x3]
    %vm1057 = vcmask 130048
    %v1059 = vsel %vm1057, %v1056, 0
    %1061 = vmatprep.subr.mxu0 0.0
    %1062 = vmatpush1.msra.mxu0 0.0
    %1063 = vmatprep.subr.mxu0 0.0
    %1064 = vmatpush1.msra.mxu0 0.0
    %1065 = vmatprep.subr.mxu0 0.0
    %1066 = vmatpush1.msra.mxu0 0.0
    %1067 = vmatprep.subr.mxu0 0.0
    %1068 = vmatpush1.msra.mxu0 0.0
    %1069 = vmatprep.subr.mxu0 0.0
    %1070 = vmatpush1.msra.mxu0 0.0
    %1071 = vmatprep.subr.mxu0 0.0
    %1072 = vmatpush1.msra.mxu0 0.0
    %1073 = vmatprep.subr.mxu0 0.0
    %1074 = vmatpush1.msra.mxu0 0.0
    %1075 = vmatprep.subr.mxu0 0.0
    %1076 = vmatpush1.msra.mxu0 0.0
    %1077 = vmatprep.subr.mxu0 0.0
    %1078 = vmatpush1.msra.mxu0 0.0
    %1079 = vmatprep.subr.mxu0 0.0
    %1080 = vmatpush1.msra.mxu0 0.0
    %1081 = vmatprep.subr.mxu0 0.0
    %1082 = vmatpush1.msra.mxu0 0.0
    %1083 = vmatprep.subr.mxu0 0.0
    %1084 = vmatpush1.msra.mxu0 0.0
    %1085 = vmatprep.subr.mxu0 0.0
    %1086 = vmatpush1.msra.mxu0 0.0
    %1087 = vmatprep.subr.mxu0 0.0
    %1088 = vmatpush1.msra.mxu0 0.0
    %1089 = vmatprep.subr.mxu0 0.0
    %1090 = vmatpush1.msra.mxu0 %v1053
    %1091 = vmatprep.subr.mxu0 0.0
    %1092 = vmatpush1.msra.mxu0 %v1048
    %1093 = vmatprep.subr.mxu0 0.0
    %1094 = vmatpush2.msra.mxu0 0.0
    %1095 = vmatprep.subr.mxu0 0.0
    %1096 = vmatpush2.msra.mxu0 0.0
    %1097 = vmatprep.subr.mxu0 0.0
    %1098 = vmatpush2.msra.mxu0 0.0
    %1099 = vmatprep.subr.mxu0 0.0
    %1100 = vmatpush2.msra.mxu0 0.0
    %1101 = vmatprep.subr.mxu0 0.0
    %1102 = vmatpush2.msra.mxu0 0.0
    %1103 = vmatprep.subr.mxu0 0.0
    %1104 = vmatpush2.msra.mxu0 0.0
    %1105 = vmatprep.subr.mxu0 0.0
    %1106 = vmatpush2.msra.mxu0 0.0
    %1107 = vmatprep.subr.mxu0 0.0
    %1108 = vmatpush2.msra.mxu0 0.0
    %1109 = vmatprep.subr.mxu0 0.0
    %1110 = vmatpush2.msra.mxu0 0.0
    %1111 = vmatprep.subr.mxu0 0.0
    %1112 = vmatpush2.msra.mxu0 0.0
    %1113 = vmatprep.subr.mxu0 0.0
    %1114 = vmatpush2.msra.mxu0 0.0
    %1115 = vmatprep.subr.mxu0 0.0
    %1116 = vmatpush2.msra.mxu0 0.0
    %1117 = vmatprep.subr.mxu0 0.0
    %1118 = vmatpush2.msra.mxu0 0.0
    %1119 = vmatprep.subr.mxu0 0.0
    %1120 = vmatpush2.msra.mxu0 0.0
    %1121 = vmatprep.subr.mxu0 0.0
    %1122 = vmatpush2.msra.mxu0 0.0
    %1123 = vmatprep.subr.mxu0 0.0
    %1124 = vmatpush2.msra.mxu0 0.0
    %1125 = vmatprep.mubr.f32.mxu0 0.0
    %1126 = vmatmul.mubr.f32.gmra.mxu0 %v1059
    %v1127 = vpop.f32.mrf.mxu0
    %v1128 = vadd.f32 0.0, %v1127
    %v1129 = vpop.f32.mrf.mxu0
    %1130 = vdwg.mxu0
    %vm1131 = vcmask 254976
    %1132 = vst.msk [vmem:[#allocation2] sm:$0x3] %vm1131, %v1128
    // Predicated region
    $region46: #{deepseek_moe.1} parent=1 // pred_check
      _
    $region47: #{deepseek_moe.1} parent=1 // pred_check_branch
      %1134 = sbr.rel (0) target = $region49
    $region48: #{deepseek_moe.1} parent=1 // pred_region
      %s1136 = ssub.s32 32, 32
      %1137 = vsyncadd [#allocation3], %s1136
      %s1139 = sshll.u32 [#allocation2], 4
      %s1140 = int_to_ptr.vmem [resolvable:$true] %s1139
      %1142 = dma.vmem_to_hbm [thread:$0]  %s1140, 32, %s11, [#allocation3]
    $region49: #{deepseek_moe.1} parent=1 // pred_fallthru
      _
    // Predicated region
    $region50: #{deepseek_moe.1} parent=1 // pred_check
      _
    $region51: #{deepseek_moe.1} parent=1 // pred_check_branch
      %1144 = sbr.rel (0) target = $region53
    $region52: #{deepseek_moe.1} parent=1 // pred_region
      %1145 = dma.done [#allocation3], 32
    $region53: #{deepseek_moe.1} parent=1 // pred_fallthru
      _
    %1146 = vsyncpa [#allocation3], 1

</llo_original>
